<compile_context>
chip_gen: v7x
topology: tpu7x:2x2x1
jax: 0.10.0
libtpu: 0.0.40
codegen_flags: <defaults>
</compile_context>

<pallas_src>
import functools

import jax
import jax.numpy as jnp
from jax.experimental import pallas as pl
from jax.experimental.pallas import tpu as pltpu


def _dice_partial_kernel(logits_ref, labels_ref, inter_ref, union_ref, *,
                         tile_hw, hw_total, tiles_per_core, has_partial):
    """Accumulates per-(batch, class) intersection / union partial sums.

    logits_ref : (N, C, T)  f32/bf16 tile in VMEM
    labels_ref : (N, T)     integer tile in VMEM (any int width <= 32)
    inter_ref  : (1, N, C)  f32 output block (one per parallel slice p)
    union_ref  : (1, N, C)  f32 output block (one per parallel slice p)
    """
    p = pl.program_id(0)
    j = pl.program_id(1)

    @pl.when(j == 0)
    def _init():
        inter_ref[...] = jnp.zeros_like(inter_ref)
        union_ref[...] = jnp.zeros_like(union_ref)

    logits = logits_ref[...].astype(jnp.float32)              # (N, C, T)
    labels = labels_ref[...].astype(jnp.int32)                # (N, T)

    # numerically-stable softmax over the class axis
    m = jnp.max(logits, axis=1, keepdims=True)                # (N, 1, T)
    e = jnp.exp(logits - m)                                    # (N, C, T)
    denom = jnp.sum(e, axis=1, keepdims=True)                  # (N, 1, T)
    probs = e * pl.reciprocal(denom, approx=False)             # (N, C, T)

    # boolean one-hot membership via a tiny (1, C, 1) class-id iota
    c = logits.shape[1]
    class_ids = jax.lax.broadcasted_iota(jnp.int32, (1, c, 1), 1)
    hit = labels[:, None, :] == class_ids                      # (N, C, T) bool

    def _accumulate(hit_m, probs_bg):
        # intersection: sum over valid columns of probs where the class matches
        inter_ref[0] += jnp.sum(jnp.where(hit_m, probs, 0.0), axis=2)
        # fused union: sum(probs) + one-hot count in a single reduction stream
        union_ref[0] += jnp.sum(jnp.where(hit_m, probs + 1.0, probs_bg), axis=2)

    if has_partial:
        g = p * tiles_per_core + j                              # global tile index

        @pl.when((g + 1) * tile_hw <= hw_total)
        def _full_tile():
            _accumulate(hit, probs)

        @pl.when((g + 1) * tile_hw > hw_total)
        def _ragged_tile():
            # mask columns past the true spatial extent (ragged / dummy tiles);
            # selects only, so garbage in padded columns never propagates.
            col = (jax.lax.broadcasted_iota(jnp.int32, (1, 1, tile_hw), 2)
                   + g * tile_hw)
            valid = col < hw_total                              # (1, 1, T)
            _accumulate(jnp.logical_and(hit, valid),
                        jnp.where(valid, probs, 0.0))
    else:
        _accumulate(hit, probs)


def _vmem_capacity_bytes():
    try:
        return int(pltpu.get_tpu_info().vmem_capacity_bytes)
    except Exception:
        return 64 << 20        # conservative fallback (v7x per-TC VMEM)


def _pick_tile_hw(N, C, HW, logit_bytes, label_bytes, vmem_cap):
    """Largest lane-aligned spatial tile whose working set hits the target."""
    # smaller target on 64 MiB parts (v7x), larger on 128 MiB parts (v5e/v6e)
    target = (5 << 20) if vmem_cap <= (64 << 20) else (14 << 20)
    # bytes per spatial column: 2x double-buffered input blocks + in-kernel
    # f32 temporaries (upcast logits / exp / contribs) + bool mask + i32 labels
    per_col = (2 * (N * C * logit_bytes + N * label_bytes)
               + N * C * (3 * 4 + 1) + N * 4)
    t = (target // max(per_col, 1)) // 128 * 128
    t = max(128, int(t))
    return HW if HW <= t else t


def multiclass_dice_loss(y_pred, y_true, smooth=1e-6, tile_hw=None):
    """y_pred: (N, C, H, W) float logits; y_true: (N, H, W) integer labels."""
    N, C, H, W = y_pred.shape
    HW = H * W

    # bf16/f16 logits stay narrow in HBM (half DMA bytes); never downcast f32.
    if y_pred.dtype in (jnp.bfloat16, jnp.float16, jnp.float32):
        logits = y_pred.reshape(N, C, HW)
    else:
        logits = y_pred.astype(jnp.float32).reshape(N, C, HW)

    # labels pass through in their native narrow dtype (no widening HBM pass)
    if jnp.issubdtype(y_true.dtype, jnp.integer) and y_true.dtype.itemsize <= 4:
        labels = y_true.reshape(N, HW)
    else:
        labels = y_true.astype(jnp.int32).reshape(N, HW)

    logit_bytes = logits.dtype.itemsize
    label_bytes = labels.dtype.itemsize
    vmem_cap = _vmem_capacity_bytes()

    if tile_hw is None:
        tile_hw = _pick_tile_hw(N, C, HW, logit_bytes, label_bytes, vmem_cap)
    tile_hw = int(min(tile_hw, HW))
    if tile_hw < HW:
        tile_hw = max(128, (tile_hw // 128) * 128)

    num_tiles = int(pl.cdiv(HW, tile_hw))
    # leading "parallel" axis: on v7x each TensorCore streams half the tiles
    P = 2 if num_tiles >= 2 else 1
    tiles_per_core = int(pl.cdiv(num_tiles, P))
    has_partial = (HW % tile_hw != 0) or (tiles_per_core * P != num_tiles)
    last_tile = num_tiles - 1

    def logits_index(p, j):
        return (0, 0, jnp.minimum(p * tiles_per_core + j, last_tile))

    def labels_index(p, j):
        return (0, jnp.minimum(p * tiles_per_core + j, last_tile))

    def out_index(p, j):
        return (p, 0, 0)

    # scoped-VMEM budget: double-buffered inputs + in-kernel temporaries,
    # clamped to the real per-TC capacity (v7x has only 64 MiB).
    block_bytes = N * C * tile_hw * logit_bytes + N * tile_hw * label_bytes
    temp_bytes = N * C * tile_hw * (3 * 4 + 1) + N * tile_hw * 4
    vmem_limit = int(min(max(2 * (2 * block_bytes + temp_bytes) + (1 << 20),
                             32 << 20),
                         int(vmem_cap * 0.85)))

    kernel = functools.partial(
        _dice_partial_kernel, tile_hw=tile_hw, hw_total=HW,
        tiles_per_core=tiles_per_core, has_partial=has_partial)

    inter, union = pl.pallas_call(
        kernel,
        out_shape=(jax.ShapeDtypeStruct((P, N, C), jnp.float32),
                   jax.ShapeDtypeStruct((P, N, C), jnp.float32)),
        grid=(P, tiles_per_core),
        in_specs=[
            pl.BlockSpec((N, C, tile_hw), logits_index),
            pl.BlockSpec((N, tile_hw), labels_index),
        ],
        out_specs=(
            pl.BlockSpec((1, N, C), out_index),
            pl.BlockSpec((1, N, C), out_index),
        ),
        compiler_params=pltpu.CompilerParams(
            dimension_semantics=("parallel", "arbitrary"),
            vmem_limit_bytes=vmem_limit),
        cost_estimate=pl.CostEstimate(
            flops=9 * N * C * HW,
            transcendentals=N * C * HW,
            bytes_accessed=(N * C * HW * logit_bytes + N * HW * label_bytes
                            + 2 * P * N * C * 4)),
    )(logits, labels)

    # tiny dice / mean finalize in plain JAX (also reduces over the P slices)
    inter = jnp.sum(inter, axis=0)                     # (N, C)
    union = jnp.sum(union, axis=0)                     # (N, C)
    dice = (2.0 * inter + jnp.float32(smooth)) / (union + jnp.float32(smooth))
    return 1.0 - jnp.mean(dice)


def _reference(y_pred, y_true, smooth=1e-6):
    # pure-JAX reference mirroring the PyTorch module
    num_classes = y_pred.shape[1]
    onehot = jax.nn.one_hot(y_true, num_classes, dtype=jnp.float32)      # (N,H,W,C)
    onehot = jnp.transpose(onehot, (0, 3, 1, 2))                          # (N,C,H,W)
    probs = jax.nn.softmax(y_pred.astype(jnp.float32), axis=1)
    intersection = jnp.sum(probs * onehot, axis=(2, 3))
    union = jnp.sum(probs, axis=(2, 3)) + jnp.sum(onehot, axis=(2, 3))
    dice = (2.0 * intersection + smooth) / (union + smooth)
    return 1.0 - jnp.mean(dice)


if __name__ == "__main__":
    key = jax.random.PRNGKey(0)
    k1, k2, k3, k4 = jax.random.split(key, 4)

    # Case 1: small spec shapes; tile forced to 128 so the 2-tile grid exercises
    # the parallel axis + init / accumulate path (one full tile per core).
    N, C, H, W = 2, 4, 16, 16
    y_pred = jax.random.normal(k1, (N, C, H, W), dtype=jnp.float32)
    y_true = jax.random.randint(k2, (N, H, W), 0, C, dtype=jnp.int32)
    loss = jax.block_until_ready(multiclass_dice_loss(y_pred, y_true, tile_hw=128))
    ref = _reference(y_pred, y_true)
    assert jnp.allclose(loss, ref, atol=1e-5, rtol=1e-5), (loss, ref)

    # Case 2: HW not a multiple of the tile AND an odd tile count -> exercises
    # the pl.when-gated ragged mask, the clamped index_map and the dummy tile.
    N2, C2, H2, W2 = 2, 5, 17, 19
    y_pred2 = jax.random.normal(k3, (N2, C2, H2, W2), dtype=jnp.float32)
    y_true2 = jax.random.randint(k4, (N2, H2, W2), 0, C2, dtype=jnp.int32)
    loss2 = jax.block_until_ready(multiclass_dice_loss(y_pred2, y_true2, tile_hw=128))
    ref2 = _reference(y_pred2, y_true2)
    assert jnp.allclose(loss2, ref2, atol=1e-5, rtol=1e-5), (loss2, ref2)

    # Case 3: bf16 logits kept bf16 in HBM (half the DMA bytes), f32 in-kernel.
    y_pred_bf16 = y_pred.astype(jnp.bfloat16)
    loss3 = jax.block_until_ready(multiclass_dice_loss(y_pred_bf16, y_true, tile_hw=128))
    ref3 = _reference(y_pred_bf16.astype(jnp.float32), y_true)
    assert jnp.allclose(loss3, ref3, atol=2e-3, rtol=2e-3), (loss3, ref3)

    # Case 4: automatic tile selection (single full-extent tile, P=1 path).
    loss4 = jax.block_until_ready(multiclass_dice_loss(y_pred, y_true))
    assert jnp.allclose(loss4, ref, atol=1e-5, rtol=1e-5), (loss4, ref)

    print("KERNEL_OK")
</pallas_src>

<mosaic_0001>
module attributes {stable_mosaic.version = 11 : i64} {
  func.func @_dice_partial_kernel(%arg0: i32, %arg1: i32, %arg2: memref<2x4x128xf32, #tpu.memory_space<vmem>>, %arg3: memref<2x128xi32, #tpu.memory_space<vmem>>, %arg4: memref<1x2x4xf32, #tpu.memory_space<vmem>>, %arg5: memref<1x2x4xf32, #tpu.memory_space<vmem>>) attributes {dimension_semantics = [#tpu.dimension_semantics<parallel>, #tpu.dimension_semantics<arbitrary>], iteration_bounds = array<i64: 2, 1>, scalar_prefetch = 0 : i64, scratch_operands = 0 : i64, tpu.core_type = #tpu.core_type<tc>, window_params = [{transform_indices = @transform_0, window_bounds = array<i64: 2, 4, 128>}, {transform_indices = @transform_1, window_bounds = array<i64: 2, 128>}, {transform_indices = @transform_2, window_bounds = array<i64: 1, 2, 4>}, {transform_indices = @transform_3, window_bounds = array<i64: 1, 2, 4>}]} {
    %c0_i32 = arith.constant 0 : i32
    %0 = arith.cmpi eq, %arg1, %c0_i32 : i32
    %1 = arith.extui %0 : i1 to i32
    %c0_i32_0 = arith.constant 0 : i32
    %2 = arith.cmpi ne, %1, %c0_i32_0 : i32
    scf.if %2 {
      %cst_22 = arith.constant 0.000000e+00 : f32
      %39 = vector.broadcast %cst_22 : f32 to vector<1x2x4xf32>
      %c0_23 = arith.constant 0 : index
      %c0_24 = arith.constant 0 : index
      %c0_25 = arith.constant 0 : index
      %40 = vector.load %arg4[%c0_23, %c0_24, %c0_25] : memref<1x2x4xf32, #tpu.memory_space<vmem>>, vector<1x2x4xf32>
      tpu.vector_store %arg4[%c0_23, %c0_24, %c0_25], %39 {strides = array<i32>} : memref<1x2x4xf32, #tpu.memory_space<vmem>>, vector<1x2x4xf32>,
      %cst_26 = arith.constant 0.000000e+00 : f32
      %41 = vector.broadcast %cst_26 : f32 to vector<1x2x4xf32>
      %c0_27 = arith.constant 0 : index
      %c0_28 = arith.constant 0 : index
      %c0_29 = arith.constant 0 : index
      %42 = vector.load %arg5[%c0_27, %c0_28, %c0_29] : memref<1x2x4xf32, #tpu.memory_space<vmem>>, vector<1x2x4xf32>
      tpu.vector_store %arg5[%c0_27, %c0_28, %c0_29], %41 {strides = array<i32>} : memref<1x2x4xf32, #tpu.memory_space<vmem>>, vector<1x2x4xf32>,
    } else {
    }
    %c0 = arith.constant 0 : index
    %c0_1 = arith.constant 0 : index
    %c0_2 = arith.constant 0 : index
    %3 = vector.load %arg2[%c0, %c0_1, %c0_2] : memref<2x4x128xf32, #tpu.memory_space<vmem>>, vector<2x4x128xf32>
    %c0_3 = arith.constant 0 : index
    %c0_4 = arith.constant 0 : index
    %4 = vector.load %arg3[%c0_3, %c0_4] : memref<2x128xi32, #tpu.memory_space<vmem>>, vector<2x128xi32>
    %cst = arith.constant dense<0xFF800000> : vector<2x128xf32>
    %5 = vector.multi_reduction <maximumf>, %3, %cst [1] : vector<2x4x128xf32> to vector<2x128xf32>
    %6 = vector.shape_cast %5 : vector<2x128xf32> to vector<2x1x128xf32>
    %7 = vector.broadcast %6 : vector<2x1x128xf32> to vector<2x4x128xf32>
    %8 = arith.subf %3, %7 : vector<2x4x128xf32>
    %9 = math.exp %8 : vector<2x4x128xf32>
    %cst_5 = arith.constant dense<0.000000e+00> : vector<2x128xf32>
    %10 = vector.multi_reduction <add>, %9, %cst_5 [1] : vector<2x4x128xf32> to vector<2x128xf32>
    %11 = vector.shape_cast %10 : vector<2x128xf32> to vector<2x1x128xf32>
    %12 = tpu.reciprocal %11 : vector<2x1x128xf32> -> vector<2x1x128xf32>
    %13 = vector.broadcast %12 : vector<2x1x128xf32> to vector<2x4x128xf32>
    %14 = arith.mulf %9, %13 : vector<2x4x128xf32>
    %15 = tpu.iota {dimensions = array<i32: 1>} : vector<1x4x1xi32>
    %16 = vector.shape_cast %4 : vector<2x128xi32> to vector<2x1x128xi32>
    %17 = vector.broadcast %16 : vector<2x1x128xi32> to vector<2x4x128xi32>
    %18 = vector.broadcast %15 : vector<1x4x1xi32> to vector<2x4x128xi32>
    %19 = arith.cmpi eq, %17, %18 : vector<2x4x128xi32>
    %c0_6 = arith.constant 0 : index
    %c0_7 = arith.constant 0 : index
    %c0_8 = arith.constant 0 : index
    %20 = vector.load %arg4[%c0_6, %c0_7, %c0_8] : memref<1x2x4xf32, #tpu.memory_space<vmem>>, vector<1x2x4xf32>
    %21 = vector.shape_cast %20 : vector<1x2x4xf32> to vector<2x4xf32>
    %cst_9 = arith.constant 0.000000e+00 : f32
    %22 = vector.broadcast %cst_9 : f32 to vector<2x4x128xf32>
    %23 = arith.select %19, %14, %22 : vector<2x4x128xi1>, vector<2x4x128xf32>
    %cst_10 = arith.constant dense<0.000000e+00> : vector<2x4xf32>
    %24 = vector.multi_reduction <add>, %23, %cst_10 [2] : vector<2x4x128xf32> to vector<2x4xf32>
    %25 = arith.addf %21, %24 : vector<2x4xf32>
    %c0_11 = arith.constant 0 : index
    %c0_12 = arith.constant 0 : index
    %c0_13 = arith.constant 0 : index
    %26 = vector.load %arg4[%c0_11, %c0_12, %c0_13] : memref<1x2x4xf32, #tpu.memory_space<vmem>>, vector<1x2x4xf32>
    %27 = vector.shape_cast %26 : vector<1x2x4xf32> to vector<2x4xf32>
    %28 = vector.shape_cast %25 : vector<2x4xf32> to vector<1x2x4xf32>
    tpu.vector_store %arg4[%c0_11, %c0_12, %c0_13], %28 {strides = array<i32>} : memref<1x2x4xf32, #tpu.memory_space<vmem>>, vector<1x2x4xf32>,
    %c0_14 = arith.constant 0 : index
    %c0_15 = arith.constant 0 : index
    %c0_16 = arith.constant 0 : index
    %29 = vector.load %arg5[%c0_14, %c0_15, %c0_16] : memref<1x2x4xf32, #tpu.memory_space<vmem>>, vector<1x2x4xf32>
    %30 = vector.shape_cast %29 : vector<1x2x4xf32> to vector<2x4xf32>
    %cst_17 = arith.constant 1.000000e+00 : f32
    %31 = vector.broadcast %cst_17 : f32 to vector<2x4x128xf32>
    %32 = arith.addf %14, %31 : vector<2x4x128xf32>
    %33 = arith.select %19, %32, %14 : vector<2x4x128xi1>, vector<2x4x128xf32>
    %cst_18 = arith.constant dense<0.000000e+00> : vector<2x4xf32>
    %34 = vector.multi_reduction <add>, %33, %cst_18 [2] : vector<2x4x128xf32> to vector<2x4xf32>
    %35 = arith.addf %30, %34 : vector<2x4xf32>
    %c0_19 = arith.constant 0 : index
    %c0_20 = arith.constant 0 : index
    %c0_21 = arith.constant 0 : index
    %36 = vector.load %arg5[%c0_19, %c0_20, %c0_21] : memref<1x2x4xf32, #tpu.memory_space<vmem>>, vector<1x2x4xf32>
    %37 = vector.shape_cast %36 : vector<1x2x4xf32> to vector<2x4xf32>
    %38 = vector.shape_cast %35 : vector<2x4xf32> to vector<1x2x4xf32>
    tpu.vector_store %arg5[%c0_19, %c0_20, %c0_21], %38 {strides = array<i32>} : memref<1x2x4xf32, #tpu.memory_space<vmem>>, vector<1x2x4xf32>,
    return
  }
  func.func @transform_0(%arg0: i32, %arg1: i32) -> (i32, i32, i32) {
    %c1_i32 = arith.constant 1 : i32
    %0 = arith.muli %arg0, %c1_i32 : i32
    %1 = arith.addi %0, %arg1 : i32
    %c1_i32_0 = arith.constant 1 : i32
    %2 = arith.minsi %1, %c1_i32_0 : i32
    %c0_i32 = arith.constant 0 : i32
    %c0_i32_1 = arith.constant 0 : i32
    %c0_i32_2 = arith.constant 0 : i32
    return %c0_i32, %c0_i32_1, %2 : i32, i32, i32
  }
  func.func @transform_1(%arg0: i32, %arg1: i32) -> (i32, i32) {
    %c1_i32 = arith.constant 1 : i32
    %0 = arith.muli %arg0, %c1_i32 : i32
    %1 = arith.addi %0, %arg1 : i32
    %c1_i32_0 = arith.constant 1 : i32
    %2 = arith.minsi %1, %c1_i32_0 : i32
    %c0_i32 = arith.constant 0 : i32
    %c0_i32_1 = arith.constant 0 : i32
    return %c0_i32, %2 : i32, i32
  }
  func.func @transform_2(%arg0: i32, %arg1: i32) -> (i32, i32, i32) {
    %c0_i32 = arith.constant 0 : i32
    %c0_i32_0 = arith.constant 0 : i32
    %c0_i32_1 = arith.constant 0 : i32
    return %arg0, %c0_i32, %c0_i32_0 : i32, i32, i32
  }
  func.func @transform_3(%arg0: i32, %arg1: i32) -> (i32, i32, i32) {
    %c0_i32 = arith.constant 0 : i32
    %c0_i32_0 = arith.constant 0 : i32
    %c0_i32_1 = arith.constant 0 : i32
    return %arg0, %c0_i32, %c0_i32_0 : i32, i32, i32
  }
}

</mosaic_0001>

<llo_original>
// kernel: tpu_custom_call.1
$region0: #{tpu_custom_call.1}
  #allocation0 [shape = 'u32[]', space=smem, size = 0x4, offset = 0x4, fixed_abs, tag = 'smem constant byte address 0x4 - core index']
  #allocation1 [shape = 'u32[144,128]{1,0:T(1,128)}', space=vmem, size = 0x12000, scoped, tag = 'internal scratch']
  %s0 = inlined_call_operand.hbm [shape: f32[2,4,256], index: 0, kind: input, shape index: {}]
  %s1 = inlined_call_operand.hbm [shape: s32[2,256], index: 1, kind: input, shape index: {}]
  %s2 = inlined_call_operand.hbm [shape: f32[2,2,4], index: 2, kind: output, shape index: {0}]
  %s3 = inlined_call_operand.hbm [shape: f32[2,2,4], index: 3, kind: output, shape index: {1}]
  %4 = xla_tuple %s2, %s3
  %s5 = sld [smem:[#allocation0]]
  $region61: #{tpu_custom_call.1} parent=0
    _
  %s7 = ssub.s32 1, %s5
  %s8 = scalar_select 0, %s7, %s5
  $region1: #{tpu_custom_call.1} parent=0
    #allocation2 [shape = 'u8[8192]{0}', space=vmem, size = 0x2000, scoped, tag = 'input window, operand 0']
    #allocation3 [shape = 's32[2]{0}', space=sflag, size = 0x8, scoped, tag = 'scoped memory for tpu_custom_call.1']
    #allocation4 [shape = 's32[2]{0}', space=sflag, size = 0x8, scoped, tag = 'scoped memory for tpu_custom_call.1']
    #allocation5 [shape = 'u8[2048]{0}', space=vmem, size = 0x800, scoped, tag = 'input window, operand 1']
    #allocation6 [shape = 's32[2]{0}', space=sflag, size = 0x8, scoped, tag = 'scoped memory for tpu_custom_call.1']
    #allocation7 [shape = 'u8[2048]{0}', space=vmem, size = 0x800, scoped, tag = 'output window, operand 0']
    #allocation8 [shape = 'u8[2048]{0}', space=vmem, size = 0x800, scoped, tag = 'output window, operand 1']
    #allocation9 [shape = 's32[2]{0}', space=sflag, size = 0x8, scoped, tag = 'scoped memory for tpu_custom_call.1']
    %9 = vsyncpa [#allocation3], 0
    %s10 = scalar_lea.sflag [#allocation3], 1
    %11 = vsyncpa %s10, 0
    %12 = vsyncpa [#allocation6], 0
    %s13 = scalar_lea.sflag [#allocation6], 1
    %14 = vsyncpa %s13, 0
    %15 = vsyncpa [#allocation4], 0
    %s16 = scalar_lea.sflag [#allocation4], 1
    %17 = vsyncpa %s16, 0
    %18 = vsyncpa [#allocation9], 0
    %s19 = scalar_lea.sflag [#allocation9], 1
    %20 = vsyncpa %s19, 0
    loop: start=0, step=1, limit=4
    $region2: #{tpu_custom_call.1} parent=1 // loop_pre_header
      _
    $region3: #{tpu_custom_call.1} parent=1 // loop_header
      %s22 = sphi 0, %s26
      %p23 = scmp.ge.s32.totalorder %s22, 4
      %s29 = sphi 0, %s41
      %s30 = sphi 0, %s37
      %s31 = sphi 0, %s29
      %s32 = sphi 0, %s30
      %s33 = sphi 0, %s31
      %s34 = sphi 0, %s32
      %s50 = sphi 0, %s52
      %s53 = sphi 0, %s50
      %s54 = sphi 0, %s53
      %s70 = sphi 0, %s54
      %s82 = sphi 0, %s84
      %s85 = sphi 0, %s82
      %s86 = sphi 0, %s85
      %s102 = sphi 0, %s86
      %s108 = sphi 0, %s110
      %s111 = sphi 0, %s108
      %s112 = sphi 0, %s111
      %s128 = sphi 0, %s112
      %s134 = sphi 0, %s136
      %s137 = sphi 0, %s134
      %s138 = sphi 0, %s137
      %s154 = sphi 0, %s138
    $region4: #{tpu_custom_call.1} parent=1 // loop_header_branch
      %25 = sbr.rel (%p23) target = $region8
    $region5: #{tpu_custom_call.1} parent=1 // loop_body
      %s27 = ssub.s32 %s22, 1
      %s28 = ssub.s32 %s22, 2
      %s35 = sadd.s32 1, %s30
      %p36 = scmp.ge.s32.totalorder %s35, 1
      %s37 = scalar_select %p36, 0, %s35
      %s38 = sadd.s32 1, %s29
      %s39 = scalar_select %p36, %s38, %s29
      %p40 = scmp.ge.s32.totalorder %s39, 2
      %s41 = scalar_select %p40, 0, %s39
      %s42 = sadd.s32 %s29, %s30
      %p43 = scmp.lt.s32.totalorder %s42, 1
      %s44 = scalar_select %p43, %s42, 1
      %s45 = sadd.s32 %s41, %s37
      %p46 = scmp.lt.s32.totalorder %s45, 1
      %s47 = scalar_select %p46, %s45, 1
      %s48 = ssub.s32 %s44, %s47
      %p49 = scmp.eq.s32.totalorder %s48, 0
      %s51 = sadd.s32 %s50, 1
      %s52 = scalar_select %p49, %s50, %s51
      %p55 = pneg %p49
      %p56 = scmp.eq.s32.totalorder %s22, 1
      %p57 = por %p55, %p56
      %p58 = scmp.ne.s32.totalorder %s50, %s53
      %p59 = scmp.eq.s32.totalorder %s22, 0
      %p60 = por %p58, %p59
      %p61 = scmp.ne.s32.totalorder %s50, %s53
      %p62 = scmp.eq.s32.totalorder %s27, 1
      %p63 = por %p61, %p62
      %p64 = scmp.ne.s32.totalorder %s53, %s54
      %p65 = scmp.eq.s32.totalorder %s27, 0
      %p66 = por %p64, %p65
      %p67 = scmp.ne.s32.totalorder %s53, %s54
      %p68 = scmp.eq.s32.totalorder %s28, 1
      %p69 = por %p67, %p68
      %p71 = scmp.ne.s32.totalorder %s54, %s70
      %p72 = scmp.eq.s32.totalorder %s28, 0
      %p73 = por %p71, %p72
      %s74 = sadd.s32 %s29, %s30
      %p75 = scmp.lt.s32.totalorder %s74, 1
      %s76 = scalar_select %p75, %s74, 1
      %s77 = sadd.s32 %s41, %s37
      %p78 = scmp.lt.s32.totalorder %s77, 1
      %s79 = scalar_select %p78, %s77, 1
      %s80 = ssub.s32 %s76, %s79
      %p81 = scmp.eq.s32.totalorder %s80, 0
      %s83 = sadd.s32 %s82, 1
      %s84 = scalar_select %p81, %s82, %s83
      %p87 = pneg %p81
      %p88 = scmp.eq.s32.totalorder %s22, 1
      %p89 = por %p87, %p88
      %p90 = scmp.ne.s32.totalorder %s82, %s85
      %p91 = scmp.eq.s32.totalorder %s22, 0
      %p92 = por %p90, %p91
      %p93 = scmp.ne.s32.totalorder %s82, %s85
      %p94 = scmp.eq.s32.totalorder %s27, 1
      %p95 = por %p93, %p94
      %p96 = scmp.ne.s32.totalorder %s85, %s86
      %p97 = scmp.eq.s32.totalorder %s27, 0
      %p98 = por %p96, %p97
      %p99 = scmp.ne.s32.totalorder %s85, %s86
      %p100 = scmp.eq.s32.totalorder %s28, 1
      %p101 = por %p99, %p100
      %p103 = scmp.ne.s32.totalorder %s86, %s102
      %p104 = scmp.eq.s32.totalorder %s28, 0
      %p105 = por %p103, %p104
      %s106 = ssub.s32 %s29, %s41
      %p107 = scmp.eq.s32.totalorder %s106, 0
      %s109 = sadd.s32 %s108, 1
      %s110 = scalar_select %p107, %s108, %s109
      %p113 = pneg %p107
      %p114 = scmp.eq.s32.totalorder %s22, 1
      %p115 = por %p113, %p114
      %p116 = scmp.ne.s32.totalorder %s108, %s111
      %p117 = scmp.eq.s32.totalorder %s22, 0
      %p118 = por %p116, %p117
      %p119 = scmp.ne.s32.totalorder %s108, %s111
      %p120 = scmp.eq.s32.totalorder %s27, 1
      %p121 = por %p119, %p120
      %p122 = scmp.ne.s32.totalorder %s111, %s112
      %p123 = scmp.eq.s32.totalorder %s27, 0
      %p124 = por %p122, %p123
      %p125 = scmp.ne.s32.totalorder %s111, %s112
      %p126 = scmp.eq.s32.totalorder %s28, 1
      %p127 = por %p125, %p126
      %p129 = scmp.ne.s32.totalorder %s112, %s128
      %p130 = scmp.eq.s32.totalorder %s28, 0
      %p131 = por %p129, %p130
      %s132 = ssub.s32 %s29, %s41
      %p133 = scmp.eq.s32.totalorder %s132, 0
      %s135 = sadd.s32 %s134, 1
      %s136 = scalar_select %p133, %s134, %s135
      %p139 = pneg %p133
      %p140 = scmp.eq.s32.totalorder %s22, 1
      %p141 = por %p139, %p140
      %p142 = scmp.ne.s32.totalorder %s134, %s137
      %p143 = scmp.eq.s32.totalorder %s22, 0
      %p144 = por %p142, %p143
      %p145 = scmp.ne.s32.totalorder %s134, %s137
      %p146 = scmp.eq.s32.totalorder %s27, 1
      %p147 = por %p145, %p146
      %p148 = scmp.ne.s32.totalorder %s137, %s138
      %p149 = scmp.eq.s32.totalorder %s27, 0
      %p150 = por %p148, %p149
      %p151 = scmp.ne.s32.totalorder %s137, %s138
      %p152 = scmp.eq.s32.totalorder %s28, 1
      %p153 = por %p151, %p152
      %p155 = scmp.ne.s32.totalorder %s138, %s154
      %p156 = scmp.eq.s32.totalorder %s28, 0
      %p157 = por %p155, %p156
      %p158 = scmp.le.s32.totalorder 1, %s22
      %p159 = scmp.lt.s32.totalorder %s22, 3
      %p160 = pnand %p158, %p159
      %p161 = pneg %p160
      // Predicated region
      $region9: #{tpu_custom_call.1} parent=5 // pred_check
        _
      $region10: #{tpu_custom_call.1} parent=5 // pred_check_branch
        %163 = sbr.rel (%p160) target = $region12
      $region11: #{tpu_custom_call.1} parent=5 // pred_region
        %s164 = ssub.s32 %s22, 1
      $region12: #{tpu_custom_call.1} parent=5 // pred_fallthru
        _
      %p165 = scmp.lt.s32.totalorder %s22, 2
      // Predicated region
      $region13: #{tpu_custom_call.1} parent=5 // pred_check
        %p166 = pneg %p165
      $region14: #{tpu_custom_call.1} parent=5 // pred_check_branch
        %168 = sbr.rel (%p166) target = $region16
      $region15: #{tpu_custom_call.1} parent=5 // pred_region
        // Predicated region
        $region17: #{tpu_custom_call.1} parent=15 // pred_check
          %p169 = pneg %p60
        $region18: #{tpu_custom_call.1} parent=15 // pred_check_branch
          %171 = sbr.rel (%p169) target = $region20
        $region19: #{tpu_custom_call.1} parent=15 // pred_region
          %s172 = sand.u32 %s50, 1
          %s173 = scalar_lea.sflag [#allocation3], %s172
          %s174 = sand.u32 %s50, 1
          %s175 = smul.addr %s174, 8
          %s176 = scalar_lea.vmem [#allocation2], %s175
          %s177 = sadd.s32 %s29, %s30
          %p178 = scmp.lt.s32.totalorder %s177, 1
          %s179 = scalar_select %p178, %s177, 1
          %s181 = ssub.s32 128, 128
          %182 = vsyncadd %s173, %s181
          %s183 = smul.addr %s179, 64
          %s184 = scalar_lea.hbm %s0, %s183
          %s185 = sshll.u32 %s176, 4
          %s186 = int_to_ptr.vmem [resolvable:$true] %s185
          %191 = dma.hbm_to_vmem [thread:$0]  %s184, 128, %s186, %s173, 128, 64, 4
        $region20: #{tpu_custom_call.1} parent=15 // pred_fallthru
          _
        // Predicated region
        $region21: #{tpu_custom_call.1} parent=15 // pred_check
          %p192 = pneg %p92
        $region22: #{tpu_custom_call.1} parent=15 // pred_check_branch
          %194 = sbr.rel (%p192) target = $region24
        $region23: #{tpu_custom_call.1} parent=15 // pred_region
          %s195 = sand.u32 %s82, 1
          %s196 = scalar_lea.sflag [#allocation6], %s195
          %s197 = sand.u32 %s82, 1
          %s198 = smul.addr %s197, 2
          %s199 = scalar_lea.vmem [#allocation5], %s198
          %s200 = sadd.s32 %s29, %s30
          %p201 = scmp.lt.s32.totalorder %s200, 1
          %s202 = scalar_select %p201, %s200, 1
          %s204 = ssub.s32 32, 32
          %205 = vsyncadd %s196, %s204
          %s206 = smul.addr %s202, 32
          %s207 = scalar_lea.hbm %s1, %s206
          %s209 = sshll.u32 %s199, 4
          %s210 = int_to_ptr.vmem [resolvable:$true] %s209
          %212 = dma.hbm_to_vmem [thread:$0]  %s207, 32, %s210, %s196
        $region24: #{tpu_custom_call.1} parent=15 // pred_fallthru
          _
      $region16: #{tpu_custom_call.1} parent=5 // pred_fallthru
        _
      %p213 = scmp.le.s32.totalorder 1, %s22
      %p214 = scmp.lt.s32.totalorder %s22, 3
      %p215 = pnand %p213, %p214
      %p216 = pneg %p215
      // Predicated region
      $region25: #{tpu_custom_call.1} parent=5 // pred_check
        _
      $region26: #{tpu_custom_call.1} parent=5 // pred_check_branch
        %218 = sbr.rel (%p215) target = $region28
      $region27: #{tpu_custom_call.1} parent=5 // pred_region
        %s219 = ssub.s32 %s22, 1
        %s220 = sand.u32 %s53, 1
        %s221 = scalar_lea.sflag [#allocation3], %s220
        %s222 = sand.u32 %s53, 1
        %s223 = smul.addr %s222, 8
        %s224 = scalar_lea.vmem [#allocation2], %s223
        // Predicated region
        $region29: #{tpu_custom_call.1} parent=27 // pred_check
          %p225 = pneg %p66
        $region30: #{tpu_custom_call.1} parent=27 // pred_check_branch
          %227 = sbr.rel (%p225) target = $region32
        $region31: #{tpu_custom_call.1} parent=27 // pred_region
          %228 = dma.done %s221, 128
        $region32: #{tpu_custom_call.1} parent=27 // pred_fallthru
          _
        %s229 = sand.u32 %s85, 1
        %s230 = scalar_lea.sflag [#allocation6], %s229
        %s231 = sand.u32 %s85, 1
        %s232 = smul.addr %s231, 2
        %s233 = scalar_lea.vmem [#allocation5], %s232
        // Predicated region
        $region33: #{tpu_custom_call.1} parent=27 // pred_check
          %p234 = pneg %p98
        $region34: #{tpu_custom_call.1} parent=27 // pred_check_branch
          %236 = sbr.rel (%p234) target = $region36
        $region35: #{tpu_custom_call.1} parent=27 // pred_region
          %237 = dma.done %s230, 32
        $region36: #{tpu_custom_call.1} parent=27 // pred_fallthru
          _
        %s238 = sand.u32 %s53, 1
        %s239 = scalar_lea.sflag [#allocation3], %s238
        %s240 = sand.u32 %s53, 1
        %s241 = smul.addr %s240, 8
        %s242 = scalar_lea.vmem [#allocation2], %s241
        %p243 = pneg %p66
        %p244 = pneg %p63
        %s245 = sand.u32 %s85, 1
        %s246 = scalar_lea.sflag [#allocation6], %s245
        %s247 = sand.u32 %s85, 1
        %s248 = smul.addr %s247, 2
        %s249 = scalar_lea.vmem [#allocation5], %s248
        %p250 = pneg %p98
        %p251 = pneg %p95
        %p252 = pneg %p124
        %p253 = pneg %p121
        %s254 = sand.u32 %s111, 1
        %s255 = scalar_lea.sflag [#allocation4], %s254
        %s256 = sand.u32 %s111, 1
        %s257 = smul.addr %s256, 2
        %s258 = scalar_lea.vmem [#allocation7], %s257
        %p259 = pneg %p150
        %p260 = pneg %p147
        %s261 = sand.u32 %s137, 1
        %s262 = scalar_lea.sflag [#allocation9], %s261
        %s263 = sand.u32 %s137, 1
        %s264 = smul.addr %s263, 2
        %s265 = scalar_lea.vmem [#allocation8], %s264
        %s266 = sadd.s32 %s31, %s32
        %p267 = scmp.lt.s32.totalorder %s266, 1
        %s268 = scalar_select %p267, %s266, 1
        %s269 = sadd.s32 %s31, %s32
        %p270 = scmp.lt.s32.totalorder %s269, 1
        %s271 = scalar_select %p270, %s269, 1
        %p272 = scmp.eq.s32.totalorder %s32, 0
        // Predicated region
        $region37: #{tpu_custom_call.1} parent=27 // pred_check
          %p273 = pneg %p272
        $region38: #{tpu_custom_call.1} parent=27 // pred_check_branch
          %275 = sbr.rel (%p273) target = $region40
        $region39: #{tpu_custom_call.1} parent=27 // pred_region
          %vm276 = vcmask 25600
          %277 = vst.msk [vmem:[%s258] sm:$0x3] %vm276, 0.0
          %278 = vst.msk [vmem:[%s265] sm:$0x3] %vm276, 0.0
        $region40: #{tpu_custom_call.1} parent=27 // pred_fallthru
          _
        %v279 = vld [vmem:[%s224] sm:$0xf]
        %v280 = vld [vmem:[%s224 + $0x4] sm:$0xf]
        %v281 = vld [vmem:[%s233] sm:$0x3]
        %vm282 = vcmask 1043456
        %v283 = vsel %vm282, %v279, -inf
        %v284 = vrot.slane %v283, 4
        %v285 = vmax.f32 %v283, %v284
        %v286 = vrot.slane %v285, 2
        %v287 = vmax.f32 %v285, %v286
        %v288 = vrot.slane %v287, 1
        %v289 = vmax.f32 %v287, %v288
        %v290 = vsel %vm282, %v280, -inf
        %v291 = vrot.slane %v290, 4
        %v292 = vmax.f32 %v290, %v291
        %v293 = vrot.slane %v292, 2
        %v294 = vmax.f32 %v292, %v293
        %v295 = vrot.slane %v294, 1
        %v296 = vmax.f32 %v294, %v295
        %v297 = vsub.f32 %v279, %v289
        %v298 = vsub.f32 %v280, %v296
        %v299 = vmul.f32 %v297, 1.442695
        %v300 = vpow.pop %v299
        %v301 = vmul.f32 %v298, 1.442695
        %v302 = vpow.pop %v301
        %v303 = vsel %vm282, %v300, 0.0
        %v304 = vrot.slane %v303, 4
        %v305 = vadd.f32 %v303, %v304
        %v306 = vrot.slane %v305, 2
        %v307 = vadd.f32 %v305, %v306
        %v308 = vrot.slane %v307, 1
        %v309 = vadd.f32 %v307, %v308
        %v310 = vsel %vm282, %v302, 0.0
        %v311 = vrot.slane %v310, 4
        %v312 = vadd.f32 %v310, %v311
        %v313 = vrot.slane %v312, 2
        %v314 = vadd.f32 %v312, %v313
        %v315 = vrot.slane %v314, 1
        %v316 = vadd.f32 %v314, %v315
        %v317 = vrcp.pop %v309
        %v318 = vrcp.pop %v316
        %v319 = vmul.f32 %v300, %v317
        %v320 = vmul.f32 %v302, %v318
        %v321 = vlaneseq
        %v322 = vshrl.u32 %v321, 7
        %v324 = vunpack.c.l.s4 1966171168
        %v325 = vunpack.c.0.s8 %v324
        %v326 = vlaneseq
        %v327 = vshrl.u32 %v326, 7
        %v328 = vsub.s32 %v325, %v327
        %v329 = vrot.slane %v281, %v328
        %v330 = vcombine.high %v329, %v329
        %v332 = vunpack.c.l.s4 1966171168
        %v333 = vunpack.c.0.s8 %v332
        %v334 = vlaneseq
        %v335 = vshrl.u32 %v334, 7
        %v336 = vsub.s32 %v333, %v335
        %v337 = vrot.slane %v329, %v336
        %v339 = vunpack.c.l.s4 1966171168
        %v340 = vunpack.c.0.s8 %v339
        %v341 = vlaneseq
        %v342 = vshrl.u32 %v341, 7
        %v343 = vsub.s32 %v340, %v342
        %v344 = vrot.slane %v330, %v343
        %v345 = vlaneseq
        %v346 = vshrl.u32 %v345, 7
        %v347 = vsub.s32 0, %v346
        %v348 = vrot.slane %v337, %v347
        %v349 = vlaneseq
        %v350 = vshrl.u32 %v349, 7
        %v351 = vsub.s32 0, %v350
        %v352 = vrot.slane %v344, %v351
        %vm353 = vcmp.eq.s32.totalorder %v348, %v322
        %vm354 = vcmp.eq.s32.totalorder %v352, %v322
        %v355 = vld [vmem:[%s258] sm:$0x3]
        %v356 = vsel %vm353, %v319, 0.0
        %v357 = vsel %vm354, %v320, 0.0
        %v358 = vsel %vm282, %v356, 0.0
        %359 = vadd.xlane.f32.xlu0 %v358
        %v360 = vpop.xlane.xlu0 %359
        %v361 = vsel %vm282, %v357, 0.0
        %362 = vadd.xlane.f32.xlu0 %v361
        %v363 = vpop.xlane.xlu0 %362
        %v366 = vlaneseq
        %v367 = vand.u32 %v366, 127
        %v368 = vlaneseq
        %v369 = vshrl.u32 %v368, 7
        %v370 = vsub.s32 %v367, %v369
        %v371 = vrot.slane %v360, %v370
        %v372 = vlaneseq
        %v373 = vshrl.u32 %v372, 7
        %v374 = vsub.s32 %v367, %v373
        %v375 = vrot.slane %v363, %v374
        %vm376 = vcmask 1041409
        %v377 = vsel %vm376, %v375, %v371
        %v379 = vadd.f32 %v355, %v377
        %vm380 = vcmask 25600
        %381 = vst.msk [vmem:[%s258] sm:$0x3] %vm380, %v379
        %v382 = vld [vmem:[%s265] sm:$0x3]
        %v383 = vadd.f32 %v319, 1.0
        %v384 = vadd.f32 %v320, 1.0
        %v385 = vsel %vm353, %v383, %v319
        %v386 = vsel %vm354, %v384, %v320
        %v387 = vsel %vm282, %v385, 0.0
        %388 = vadd.xlane.f32.xlu0 %v387
        %v389 = vpop.xlane.xlu0 %388
        %v390 = vsel %vm282, %v386, 0.0
        %391 = vadd.xlane.f32.xlu0 %v390
        %v392 = vpop.xlane.xlu0 %391
        %v395 = vlaneseq
        %v396 = vshrl.u32 %v395, 7
        %v397 = vsub.s32 %v367, %v396
        %v398 = vrot.slane %v389, %v397
        %v399 = vlaneseq
        %v400 = vshrl.u32 %v399, 7
        %v401 = vsub.s32 %v367, %v400
        %v402 = vrot.slane %v392, %v401
        %v403 = vsel %vm376, %v402, %v398
        %v405 = vadd.f32 %v382, %v403
        %406 = vst.msk [vmem:[%s265] sm:$0x3] %vm380, %v405
        %s407 = sand.u32 %s111, 1
        %s408 = scalar_lea.sflag [#allocation4], %s407
        %s409 = sand.u32 %s111, 1
        %s410 = smul.addr %s409, 2
        %s411 = scalar_lea.vmem [#allocation7], %s410
        %s412 = sand.u32 %s137, 1
        %s413 = scalar_lea.sflag [#allocation9], %s412
        %s414 = sand.u32 %s137, 1
        %s415 = smul.addr %s414, 2
        %s416 = scalar_lea.vmem [#allocation8], %s415
        // Predicated region
        $region41: #{tpu_custom_call.1} parent=27 // pred_check
          %p417 = pneg %p121
        $region42: #{tpu_custom_call.1} parent=27 // pred_check_branch
          %419 = sbr.rel (%p417) target = $region44
        $region43: #{tpu_custom_call.1} parent=27 // pred_region
          %s421 = ssub.s32 32, 32
          %422 = vsyncadd %s408, %s421
          %s423 = smul.addr %s31, 32
          %s424 = scalar_lea.hbm %s2, %s423
          %s426 = sshll.u32 %s411, 4
          %s427 = int_to_ptr.vmem [resolvable:$true] %s426
          %429 = dma.vmem_to_hbm [thread:$0]  %s427, 32, %s424, %s408
        $region44: #{tpu_custom_call.1} parent=27 // pred_fallthru
          _
        // Predicated region
        $region45: #{tpu_custom_call.1} parent=27 // pred_check
          %p430 = pneg %p147
        $region46: #{tpu_custom_call.1} parent=27 // pred_check_branch
          %432 = sbr.rel (%p430) target = $region48
        $region47: #{tpu_custom_call.1} parent=27 // pred_region
          %s434 = ssub.s32 32, 32
          %435 = vsyncadd %s413, %s434
          %s436 = smul.addr %s31, 32
          %s437 = scalar_lea.hbm %s3, %s436
          %s439 = sshll.u32 %s416, 4
          %s440 = int_to_ptr.vmem [resolvable:$true] %s439
          %442 = dma.vmem_to_hbm [thread:$0]  %s440, 32, %s437, %s413
        $region48: #{tpu_custom_call.1} parent=27 // pred_fallthru
          _
      $region28: #{tpu_custom_call.1} parent=5 // pred_fallthru
        _
      %p443 = scmp.le.s32.totalorder 2, %s22
      // Predicated region
      $region49: #{tpu_custom_call.1} parent=5 // pred_check
        %p444 = pneg %p443
      $region50: #{tpu_custom_call.1} parent=5 // pred_check_branch
        %446 = sbr.rel (%p444) target = $region52
      $region51: #{tpu_custom_call.1} parent=5 // pred_region
        %s447 = ssub.s32 %s22, 2
        // Predicated region
        $region53: #{tpu_custom_call.1} parent=51 // pred_check
          %p448 = pneg %p127
        $region54: #{tpu_custom_call.1} parent=51 // pred_check_branch
          %450 = sbr.rel (%p448) target = $region56
        $region55: #{tpu_custom_call.1} parent=51 // pred_region
          %s451 = sand.u32 %s112, 1
          %s452 = scalar_lea.sflag [#allocation4], %s451
          %s453 = sand.u32 %s112, 1
          %s454 = smul.addr %s453, 2
          %s455 = scalar_lea.vmem [#allocation7], %s454
          %456 = dma.done %s452, 32
        $region56: #{tpu_custom_call.1} parent=51 // pred_fallthru
          _
        // Predicated region
        $region57: #{tpu_custom_call.1} parent=51 // pred_check
          %p457 = pneg %p153
        $region58: #{tpu_custom_call.1} parent=51 // pred_check_branch
          %459 = sbr.rel (%p457) target = $region60
        $region59: #{tpu_custom_call.1} parent=51 // pred_region
          %s460 = sand.u32 %s138, 1
          %s461 = scalar_lea.sflag [#allocation9], %s460
          %s462 = sand.u32 %s138, 1
          %s463 = smul.addr %s462, 2
          %s464 = scalar_lea.vmem [#allocation8], %s463
          %465 = dma.done %s461, 32
        $region60: #{tpu_custom_call.1} parent=51 // pred_fallthru
          _
      $region52: #{tpu_custom_call.1} parent=5 // pred_fallthru
        _
    $region6: #{tpu_custom_call.1} parent=1 // loop_footer
      %s26 = sadd.s32 1, %s22
    $region7: #{tpu_custom_call.1} parent=1 // loop_footer_branch
      %21 = sbr.rel target = $region3
    $region8: #{tpu_custom_call.1} parent=1 // loop_exit
      _
    %466 = vsyncpa [#allocation3], 1
    %s467 = scalar_lea.sflag [#allocation3], 1
    %468 = vsyncpa %s467, 1
    %469 = vsyncpa [#allocation6], 1
    %s470 = scalar_lea.sflag [#allocation6], 1
    %471 = vsyncpa %s470, 1
    %472 = vsyncpa [#allocation4], 1
    %s473 = scalar_lea.sflag [#allocation4], 1
    %474 = vsyncpa %s473, 1
    %475 = vsyncpa [#allocation9], 1
    %s476 = scalar_lea.sflag [#allocation9], 1
    %477 = vsyncpa %s476, 1

</llo_original>
